<compile_context>
chip_gen: v5e
topology: v5e:2x2
jax: 0.10.0
libtpu: 0.0.40
codegen_flags: <defaults>
</compile_context>

<pallas_src>
import jax
import jax.numpy as jnp
from jax.experimental import pallas as pl
from jax.experimental.pallas import tpu as pltpu

_LANE = 128
# Double-buffered activation+output block budget: conservative enough for v5e's
# 16 MiB scoped-VMEM default, v6e's 32 MiB and v7x's 64 MiB physical VMEM.
_VMEM_BLOCK_BUDGET = 10 * (1 << 20)
_VMEM_LIMIT_BYTES = 32 * (1 << 20)
# ~1 MiB of HBM traffic per grid step comfortably hides the fixed step overhead.
_TARGET_STEP_BYTES = 1 << 20


def _conv1x1_kernel(w_ref, b_ref, x_ref, o_ref):
    """w_ref: (Cout, Cin), b_ref: (Cout, 1) -- resident in VMEM.
    x_ref: (Nblk, Cin, TILE), o_ref: (Nblk, Cout, TILE) -- pipelined blocks."""
    x = x_ref[...].astype(jnp.float32)          # spatial tile on the 128-lane axis
    w = w_ref[...].astype(jnp.float32)
    b = b_ref[...].astype(jnp.float32)
    cin = x.shape[1]

    # Pointwise conv == Cin broadcast FMAs on the VPU over (Nblk, Cout, TILE)
    # slabs. Initialize the accumulator with bias + first FMA so there is no
    # extra zero-fill / add pass.
    acc = b[None, :, :] + w[None, :, 0:1] * x[:, 0:1, :]
    for ci in range(1, cin):                    # static unroll: Cin is small
        acc = acc + w[None, :, ci:ci + 1] * x[:, ci:ci + 1, :]

    o_ref[...] = acc.astype(o_ref.dtype)        # lane-dense unmasked store


def _divisors(n):
    out = []
    i = 1
    while i * i <= n:
        if n % i == 0:
            out.append(i)
            if i != n // i:
                out.append(n // i)
        i += 1
    return sorted(out)


def out_conv(x_nchw, weight, bias):
    """OutConv forward: 1x1 conv with bias. NCHW in / NCHW out.
    weight: (Cout, Cin, 1, 1), bias: (Cout,)."""
    N, Cin, H, W = x_nchw.shape
    Cout = weight.shape[0]
    HW = H * W
    itemsize = jnp.dtype(x_nchw.dtype).itemsize

    x3 = x_nchw.reshape(N, Cin, HW)                       # contiguous reshape: free
    HW_pad = pl.cdiv(HW, _LANE) * _LANE
    if HW_pad != HW:
        # Pad the spatial axis so every store is a full, unmasked 128-lane vst
        # and the block size stays bounded (no full-extent fallback block).
        x3 = jnp.pad(x3, ((0, 0), (0, 0), (0, HW_pad - HW)))

    def _block_bytes(tile, nblk):                         # double-buffered in+out
        return 2 * nblk * (Cin + Cout) * tile * itemsize

    # --- spatial tile: biggest multiple-of-128 divisor of HW_pad that fits the
    # VMEM budget and keeps >=2 total grid steps (megacore on v7x).
    cands = sorted((d * _LANE for d in _divisors(HW_pad // _LANE)), reverse=True)
    tile_hw = _LANE
    picked = False
    for c in cands:
        if _block_bytes(c, 1) <= _VMEM_BLOCK_BUDGET and N * (HW_pad // c) >= 2:
            tile_hw, picked = c, True
            break
    if not picked:
        for c in cands:
            if _block_bytes(c, 1) <= _VMEM_BLOCK_BUDGET:
                tile_hw = c
                break

    # --- batch block: for small feature maps move several images per grid step
    # so per-step HBM traffic beats the fixed pipeline overhead, but never
    # collapse below 2 total steps and never exceed the VMEM budget.
    n_blk = 1
    for cand in _divisors(N):
        per_step = cand * (Cin + Cout) * tile_hw * itemsize
        steps = (N // cand) * (HW_pad // tile_hw)
        if 2 * per_step > _VMEM_BLOCK_BUDGET or steps < 2:
            break
        n_blk = cand
        if per_step >= _TARGET_STEP_BYTES:
            break

    w2 = weight.reshape(Cout, Cin)
    b2 = bias.reshape(Cout, 1)
    grid = (N // n_blk, HW_pad // tile_hw)

    out = pl.pallas_call(
        _conv1x1_kernel,
        out_shape=jax.ShapeDtypeStruct((N, Cout, HW_pad), x_nchw.dtype),
        grid_spec=pltpu.PrefetchScalarGridSpec(
            num_scalar_prefetch=0,
            grid=grid,
            in_specs=[
                pl.BlockSpec((Cout, Cin), lambda n, t: (0, 0)),   # weights resident
                pl.BlockSpec((Cout, 1), lambda n, t: (0, 0)),     # bias resident
                pl.BlockSpec((n_blk, Cin, tile_hw), lambda n, t: (n, 0, t)),
            ],
            out_specs=pl.BlockSpec((n_blk, Cout, tile_hw), lambda n, t: (n, 0, t)),
        ),
        compiler_params=pltpu.CompilerParams(
            dimension_semantics=("parallel", "parallel"),         # megacore on v7x
            vmem_limit_bytes=_VMEM_LIMIT_BYTES),
    )(w2, b2, x3)

    if HW_pad != HW:
        out = out[:, :, :HW]
    return out.reshape(N, Cout, H, W)                     # contiguous reshape: free


def _reference(x, weight, bias):
    """Pure-JAX reference for nn.Conv2d(Cin, Cout, kernel_size=1)."""
    w2 = weight.reshape(weight.shape[0], weight.shape[1])
    y = jnp.einsum("oc,nchw->nohw", w2, x)
    return y + bias[None, :, None, None]


if __name__ == "__main__":
    N, Cin, Cout, H, W = 2, 4, 8, 16, 16

    key = jax.random.PRNGKey(0)
    kw, kb, kx = jax.random.split(key, 3)
    # nn.Conv2d(Cin, Cout, kernel_size=1): weight (Cout, Cin, 1, 1), bias (Cout,)
    weight = 0.1 * jax.random.normal(kw, (Cout, Cin, 1, 1), jnp.float32)
    bias = 0.1 * jax.random.normal(kb, (Cout,), jnp.float32)
    x = jax.random.normal(kx, (N, Cin, H, W), jnp.float32)

    out = out_conv(x, weight, bias)
    out = jax.block_until_ready(out)

    ref = _reference(x, weight, bias)
    assert out.shape == (N, Cout, H, W)
    assert jnp.allclose(out, ref, atol=1e-5, rtol=1e-5), \
        f"max abs err {jnp.max(jnp.abs(out - ref))}"

    print("KERNEL_OK")
</pallas_src>

<mosaic_0001>
module attributes {stable_mosaic.version = 11 : i64} {
  func.func @_conv1x1_kernel(%arg0: i32, %arg1: i32, %arg2: memref<8x4xf32, #tpu.memory_space<vmem>>, %arg3: memref<8x1xf32, #tpu.memory_space<vmem>>, %arg4: memref<1x4x256xf32, #tpu.memory_space<vmem>>, %arg5: memref<1x8x256xf32, #tpu.memory_space<vmem>>) attributes {dimension_semantics = [#tpu.dimension_semantics<parallel>, #tpu.dimension_semantics<parallel>], iteration_bounds = array<i64: 2, 1>, scalar_prefetch = 0 : i64, scratch_operands = 0 : i64, tpu.core_type = #tpu.core_type<tc>, window_params = [{pipeline_mode = #tpu.pipeline_mode<synchronous>, transform_indices = @transform_0, window_bounds = array<i64: 8, 4>}, {pipeline_mode = #tpu.pipeline_mode<synchronous>, transform_indices = @transform_1, window_bounds = array<i64: 8, 1>}, {transform_indices = @transform_2, window_bounds = array<i64: 1, 4, 256>}, {transform_indices = @transform_3, window_bounds = array<i64: 1, 8, 256>}]} {
    %c0 = arith.constant 0 : index
    %c0_0 = arith.constant 0 : index
    %c0_1 = arith.constant 0 : index
    %0 = vector.load %arg4[%c0, %c0_0, %c0_1] : memref<1x4x256xf32, #tpu.memory_space<vmem>>, vector<1x4x256xf32>
    %c0_2 = arith.constant 0 : index
    %c0_3 = arith.constant 0 : index
    %1 = vector.load %arg2[%c0_2, %c0_3] : memref<8x4xf32, #tpu.memory_space<vmem>>, vector<8x4xf32>
    %c0_4 = arith.constant 0 : index
    %c0_5 = arith.constant 0 : index
    %2 = vector.load %arg3[%c0_4, %c0_5] : memref<8x1xf32, #tpu.memory_space<vmem>>, vector<8x1xf32>
    %3 = vector.shape_cast %2 : vector<8x1xf32> to vector<1x8x1xf32>
    %4 = vector.extract_strided_slice %1 {offsets = [0, 0], sizes = [8, 1], strides = [1, 1]} : vector<8x4xf32> to vector<8x1xf32>
    %5 = vector.shape_cast %4 : vector<8x1xf32> to vector<1x8x1xf32>
    %6 = vector.extract_strided_slice %0 {offsets = [0, 0, 0], sizes = [1, 1, 256], strides = [1, 1, 1]} : vector<1x4x256xf32> to vector<1x1x256xf32>
    %7 = vector.broadcast %5 : vector<1x8x1xf32> to vector<1x8x256xf32>
    %8 = vector.broadcast %6 : vector<1x1x256xf32> to vector<1x8x256xf32>
    %9 = arith.mulf %7, %8 : vector<1x8x256xf32>
    %10 = vector.broadcast %3 : vector<1x8x1xf32> to vector<1x8x256xf32>
    %11 = arith.addf %10, %9 : vector<1x8x256xf32>
    %12 = vector.extract_strided_slice %1 {offsets = [0, 1], sizes = [8, 1], strides = [1, 1]} : vector<8x4xf32> to vector<8x1xf32>
    %13 = vector.shape_cast %12 : vector<8x1xf32> to vector<1x8x1xf32>
    %14 = vector.extract_strided_slice %0 {offsets = [0, 1, 0], sizes = [1, 1, 256], strides = [1, 1, 1]} : vector<1x4x256xf32> to vector<1x1x256xf32>
    %15 = vector.broadcast %13 : vector<1x8x1xf32> to vector<1x8x256xf32>
    %16 = vector.broadcast %14 : vector<1x1x256xf32> to vector<1x8x256xf32>
    %17 = arith.mulf %15, %16 : vector<1x8x256xf32>
    %18 = arith.addf %11, %17 : vector<1x8x256xf32>
    %19 = vector.extract_strided_slice %1 {offsets = [0, 2], sizes = [8, 1], strides = [1, 1]} : vector<8x4xf32> to vector<8x1xf32>
    %20 = vector.shape_cast %19 : vector<8x1xf32> to vector<1x8x1xf32>
    %21 = vector.extract_strided_slice %0 {offsets = [0, 2, 0], sizes = [1, 1, 256], strides = [1, 1, 1]} : vector<1x4x256xf32> to vector<1x1x256xf32>
    %22 = vector.broadcast %20 : vector<1x8x1xf32> to vector<1x8x256xf32>
    %23 = vector.broadcast %21 : vector<1x1x256xf32> to vector<1x8x256xf32>
    %24 = arith.mulf %22, %23 : vector<1x8x256xf32>
    %25 = arith.addf %18, %24 : vector<1x8x256xf32>
    %26 = vector.extract_strided_slice %1 {offsets = [0, 3], sizes = [8, 1], strides = [1, 1]} : vector<8x4xf32> to vector<8x1xf32>
    %27 = vector.shape_cast %26 : vector<8x1xf32> to vector<1x8x1xf32>
    %28 = vector.extract_strided_slice %0 {offsets = [0, 3, 0], sizes = [1, 1, 256], strides = [1, 1, 1]} : vector<1x4x256xf32> to vector<1x1x256xf32>
    %29 = vector.broadcast %27 : vector<1x8x1xf32> to vector<1x8x256xf32>
    %30 = vector.broadcast %28 : vector<1x1x256xf32> to vector<1x8x256xf32>
    %31 = arith.mulf %29, %30 : vector<1x8x256xf32>
    %32 = arith.addf %25, %31 : vector<1x8x256xf32>
    %c0_6 = arith.constant 0 : index
    %c0_7 = arith.constant 0 : index
    %c0_8 = arith.constant 0 : index
    %33 = vector.load %arg5[%c0_6, %c0_7, %c0_8] : memref<1x8x256xf32, #tpu.memory_space<vmem>>, vector<1x8x256xf32>
    tpu.vector_store %arg5[%c0_6, %c0_7, %c0_8], %32 {strides = array<i32>} : memref<1x8x256xf32, #tpu.memory_space<vmem>>, vector<1x8x256xf32>,
    return
  }
  func.func @transform_0(%arg0: i32, %arg1: i32) -> (i32, i32) {
    %c0_i32 = arith.constant 0 : i32
    %c0_i32_0 = arith.constant 0 : i32
    %c0_i32_1 = arith.constant 0 : i32
    return %c0_i32, %c0_i32_0 : i32, i32
  }
  func.func @transform_1(%arg0: i32, %arg1: i32) -> (i32, i32) {
    %c0_i32 = arith.constant 0 : i32
    %c0_i32_0 = arith.constant 0 : i32
    %c0_i32_1 = arith.constant 0 : i32
    return %c0_i32, %c0_i32_0 : i32, i32
  }
  func.func @transform_2(%arg0: i32, %arg1: i32) -> (i32, i32, i32) {
    %c0_i32 = arith.constant 0 : i32
    %c0_i32_0 = arith.constant 0 : i32
    return %arg0, %c0_i32, %arg1 : i32, i32, i32
  }
  func.func @transform_3(%arg0: i32, %arg1: i32) -> (i32, i32, i32) {
    %c0_i32 = arith.constant 0 : i32
    %c0_i32_0 = arith.constant 0 : i32
    return %arg0, %c0_i32, %arg1 : i32, i32, i32
  }
}

</mosaic_0001>

<llo_original>
// kernel: tpu_custom_call.1
$region0: #{tpu_custom_call.1}
  #allocation0 [shape = 'u32[]', space=smem, size = 0x4, offset = 0x4, fixed_abs, tag = 'smem constant byte address 0x4 - core index']
  #allocation1 [shape = 'u32[72,128]{1,0:T(1,128)}', space=vmem, size = 0x9000, scoped, tag = 'internal scratch']
  %s0 = inlined_call_operand.vmem [shape: f32[8,4], index: 0, kind: input, shape index: {}]
  %s1 = inlined_call_operand.vmem [shape: f32[8,1], index: 1, kind: input, shape index: {}]
  %s2 = inlined_call_operand.vmem [shape: f32[2,4,256], index: 2, kind: input, shape index: {}]
  %s3 = inlined_call_operand.hbm [shape: f32[2,8,256], index: 3, kind: output, shape index: {}]
  %s4 = sld [smem:[#allocation0]]
  $region45: #{tpu_custom_call.1} parent=0
    _
  %s6 = ssub.s32 1, %s4
  %s7 = scalar_select 0, %s6, %s4
  $region1: #{tpu_custom_call.1} parent=0
    #allocation2 [shape = 'u8[16384]{0}', space=vmem, size = 0x4000, scoped, tag = 'output window, operand 0']
    #allocation3 [shape = 's32[2]{0}', space=sflag, size = 0x8, scoped, tag = 'scoped memory for tpu_custom_call.1']
    %8 = vsyncpa [#allocation3], 0
    %s9 = scalar_lea.sflag [#allocation3], 1
    %10 = vsyncpa %s9, 0
    loop: start=0, step=1, limit=4
    $region2: #{tpu_custom_call.1} parent=1 // loop_pre_header
      _
    $region3: #{tpu_custom_call.1} parent=1 // loop_header
      %s12 = sphi 0, %s16
      %p13 = scmp.ge.s32.totalorder %s12, 4
      %s19 = sphi 0, %s31
      %s20 = sphi 0, %s27
      %s21 = sphi 0, %s19
      %s22 = sphi 0, %s20
      %s23 = sphi 0, %s21
      %s24 = sphi 0, %s22
      %s32 = sphi 0, %s32
      %s34 = sphi 0, %s32
      %s35 = sphi 0, %s34
      %s49 = sphi 0, %s35
      %s53 = sphi 0, %s53
      %s55 = sphi 0, %s53
      %s56 = sphi 0, %s55
      %s70 = sphi 0, %s56
      %s78 = sphi 0, %s80
      %s81 = sphi 0, %s78
      %s82 = sphi 0, %s81
      %s98 = sphi 0, %s82
      %s106 = sphi 0, %s108
      %s109 = sphi 0, %s106
      %s110 = sphi 0, %s109
      %s126 = sphi 0, %s110
    $region4: #{tpu_custom_call.1} parent=1 // loop_header_branch
      %15 = sbr.rel (%p13) target = $region8
    $region5: #{tpu_custom_call.1} parent=1 // loop_body
      %s17 = ssub.s32 %s12, 1
      %s18 = ssub.s32 %s12, 2
      %s25 = sadd.s32 1, %s20
      %p26 = scmp.ge.s32.totalorder %s25, 1
      %s27 = scalar_select %p26, 0, %s25
      %s28 = sadd.s32 1, %s19
      %s29 = scalar_select %p26, %s28, %s19
      %p30 = scmp.ge.s32.totalorder %s29, 2
      %s31 = scalar_select %p30, 0, %s29
      %s33 = sadd.s32 %s32, 1
      %p36 = scmp.eq.s32.totalorder %s12, 1
      %p37 = scmp.ne.s32.totalorder %s32, %s34
      %p38 = scmp.eq.s32.totalorder %s12, 0
      %p39 = por %p37, %p38
      %p40 = scmp.ne.s32.totalorder %s32, %s34
      %p41 = scmp.eq.s32.totalorder %s17, 1
      %p42 = por %p40, %p41
      %p43 = scmp.ne.s32.totalorder %s34, %s35
      %p44 = scmp.eq.s32.totalorder %s17, 0
      %p45 = por %p43, %p44
      %p46 = scmp.ne.s32.totalorder %s34, %s35
      %p47 = scmp.eq.s32.totalorder %s18, 1
      %p48 = por %p46, %p47
      %p50 = scmp.ne.s32.totalorder %s35, %s49
      %p51 = scmp.eq.s32.totalorder %s18, 0
      %p52 = por %p50, %p51
      %s54 = sadd.s32 %s53, 1
      %p57 = scmp.eq.s32.totalorder %s12, 1
      %p58 = scmp.ne.s32.totalorder %s53, %s55
      %p59 = scmp.eq.s32.totalorder %s12, 0
      %p60 = por %p58, %p59
      %p61 = scmp.ne.s32.totalorder %s53, %s55
      %p62 = scmp.eq.s32.totalorder %s17, 1
      %p63 = por %p61, %p62
      %p64 = scmp.ne.s32.totalorder %s55, %s56
      %p65 = scmp.eq.s32.totalorder %s17, 0
      %p66 = por %p64, %p65
      %p67 = scmp.ne.s32.totalorder %s55, %s56
      %p68 = scmp.eq.s32.totalorder %s18, 1
      %p69 = por %p67, %p68
      %p71 = scmp.ne.s32.totalorder %s56, %s70
      %p72 = scmp.eq.s32.totalorder %s18, 0
      %p73 = por %p71, %p72
      %s74 = ssub.s32 %s19, %s31
      %s75 = ssub.s32 %s20, %s27
      %s76 = sor.u32 %s74, %s75
      %p77 = scmp.eq.s32.totalorder %s76, 0
      %s79 = sadd.s32 %s78, 1
      %s80 = scalar_select %p77, %s78, %s79
      %p83 = pneg %p77
      %p84 = scmp.eq.s32.totalorder %s12, 1
      %p85 = por %p83, %p84
      %p86 = scmp.ne.s32.totalorder %s78, %s81
      %p87 = scmp.eq.s32.totalorder %s12, 0
      %p88 = por %p86, %p87
      %p89 = scmp.ne.s32.totalorder %s78, %s81
      %p90 = scmp.eq.s32.totalorder %s17, 1
      %p91 = por %p89, %p90
      %p92 = scmp.ne.s32.totalorder %s81, %s82
      %p93 = scmp.eq.s32.totalorder %s17, 0
      %p94 = por %p92, %p93
      %p95 = scmp.ne.s32.totalorder %s81, %s82
      %p96 = scmp.eq.s32.totalorder %s18, 1
      %p97 = por %p95, %p96
      %p99 = scmp.ne.s32.totalorder %s82, %s98
      %p100 = scmp.eq.s32.totalorder %s18, 0
      %p101 = por %p99, %p100
      %s102 = ssub.s32 %s19, %s31
      %s103 = ssub.s32 %s20, %s27
      %s104 = sor.u32 %s102, %s103
      %p105 = scmp.eq.s32.totalorder %s104, 0
      %s107 = sadd.s32 %s106, 1
      %s108 = scalar_select %p105, %s106, %s107
      %p111 = pneg %p105
      %p112 = scmp.eq.s32.totalorder %s12, 1
      %p113 = por %p111, %p112
      %p114 = scmp.ne.s32.totalorder %s106, %s109
      %p115 = scmp.eq.s32.totalorder %s12, 0
      %p116 = por %p114, %p115
      %p117 = scmp.ne.s32.totalorder %s106, %s109
      %p118 = scmp.eq.s32.totalorder %s17, 1
      %p119 = por %p117, %p118
      %p120 = scmp.ne.s32.totalorder %s109, %s110
      %p121 = scmp.eq.s32.totalorder %s17, 0
      %p122 = por %p120, %p121
      %p123 = scmp.ne.s32.totalorder %s109, %s110
      %p124 = scmp.eq.s32.totalorder %s18, 1
      %p125 = por %p123, %p124
      %p127 = scmp.ne.s32.totalorder %s110, %s126
      %p128 = scmp.eq.s32.totalorder %s18, 0
      %p129 = por %p127, %p128
      %p130 = scmp.le.s32.totalorder 1, %s12
      %p131 = scmp.lt.s32.totalorder %s12, 3
      %p132 = pnand %p130, %p131
      %p133 = pneg %p132
      // Predicated region
      $region9: #{tpu_custom_call.1} parent=5 // pred_check
        _
      $region10: #{tpu_custom_call.1} parent=5 // pred_check_branch
        %135 = sbr.rel (%p132) target = $region12
      $region11: #{tpu_custom_call.1} parent=5 // pred_region
        %s136 = ssub.s32 %s12, 1
        // Predicated region
        $region13: #{tpu_custom_call.1} parent=11 // pred_check
          %p137 = pneg %p45
        $region14: #{tpu_custom_call.1} parent=11 // pred_check_branch
          %139 = sbr.rel (%p137) target = $region16
        $region15: #{tpu_custom_call.1} parent=11 // pred_region
          _
        $region16: #{tpu_custom_call.1} parent=11 // pred_fallthru
          _
        // Predicated region
        $region17: #{tpu_custom_call.1} parent=11 // pred_check
          %p140 = pneg %p66
        $region18: #{tpu_custom_call.1} parent=11 // pred_check_branch
          %142 = sbr.rel (%p140) target = $region20
        $region19: #{tpu_custom_call.1} parent=11 // pred_region
          _
        $region20: #{tpu_custom_call.1} parent=11 // pred_fallthru
          _
      $region12: #{tpu_custom_call.1} parent=5 // pred_fallthru
        _
      %p143 = scmp.lt.s32.totalorder %s12, 2
      // Predicated region
      $region21: #{tpu_custom_call.1} parent=5 // pred_check
        %p144 = pneg %p143
      $region22: #{tpu_custom_call.1} parent=5 // pred_check_branch
        %146 = sbr.rel (%p144) target = $region24
      $region23: #{tpu_custom_call.1} parent=5 // pred_region
        // Predicated region
        $region25: #{tpu_custom_call.1} parent=23 // pred_check
          %p147 = pneg %p88
        $region26: #{tpu_custom_call.1} parent=23 // pred_check_branch
          %149 = sbr.rel (%p147) target = $region28
        $region27: #{tpu_custom_call.1} parent=23 // pred_region
          %s150 = smul.u32 2, %s20
          %p151 = scmp.lt.s32.totalorder %s19, 1
          %s152 = scalar_select %p151, %s19, 1
          %p153 = scmp.lt.s32.totalorder %s150, 1
          %s154 = scalar_select %p153, %s150, 1
          %s155 = smul.addr %s152, 2
          %s156 = sadd.s32 %s154, %s155
          %s157 = smul.addr %s156, 4
          %s158 = scalar_lea.vmem %s2, %s157
          %s159 = smul.u32 2, %s20
        $region28: #{tpu_custom_call.1} parent=23 // pred_fallthru
          _
      $region24: #{tpu_custom_call.1} parent=5 // pred_fallthru
        _
      %p160 = scmp.le.s32.totalorder 1, %s12
      %p161 = scmp.lt.s32.totalorder %s12, 3
      %p162 = pnand %p160, %p161
      %p163 = pneg %p162
      // Predicated region
      $region29: #{tpu_custom_call.1} parent=5 // pred_check
        _
      $region30: #{tpu_custom_call.1} parent=5 // pred_check_branch
        %165 = sbr.rel (%p162) target = $region32
      $region31: #{tpu_custom_call.1} parent=5 // pred_region
        %s166 = ssub.s32 %s12, 1
        %p167 = pneg %p45
        %p168 = pneg %p42
        %p169 = pneg %p66
        %p170 = pneg %p63
        %s171 = smul.u32 2, %s22
        %p172 = scmp.lt.s32.totalorder %s21, 1
        %s173 = scalar_select %p172, %s21, 1
        %p174 = scmp.lt.s32.totalorder %s171, 1
        %s175 = scalar_select %p174, %s171, 1
        %s176 = smul.addr %s173, 2
        %s177 = sadd.s32 %s175, %s176
        %s178 = smul.addr %s177, 4
        %s179 = scalar_lea.vmem %s2, %s178
        %p180 = pneg %p94
        %p181 = pneg %p91
        %p182 = pneg %p122
        %p183 = pneg %p119
        %s184 = sand.u32 %s109, 1
        %s185 = scalar_lea.sflag [#allocation3], %s184
        %s186 = sand.u32 %s109, 1
        %s187 = smul.addr %s186, 16
        %s188 = scalar_lea.vmem [#allocation2], %s187
        %s189 = smul.u32 2, %s22
        %p190 = scmp.lt.s32.totalorder %s21, 1
        %s191 = scalar_select %p190, %s21, 1
        %p192 = scmp.lt.s32.totalorder %s189, 1
        %s193 = scalar_select %p192, %s189, 1
        %s194 = smul.addr %s191, 2
        %s195 = sadd.s32 %s193, %s194
        %s196 = smul.addr %s195, 4
        %s197 = scalar_lea.vmem %s2, %s196
        %s198 = smul.u32 2, %s22
        %s199 = smul.u32 2, %s22
        %v200 = vld [vmem:[%s197] sm:$0xff]
        %v201 = vld [vmem:[%s0] sm:$0xff]
        %v202 = vld [vmem:[%s1] sm:$0xff]
        %204 = vset.pattern.permute.xlu0 0
        %205 = vperm.xlu0 %204, %v201
        %v206 = vpop.permute.xlu0 %205
        %v209 = vperm.slane %v200, 0
        %v210 = vperm.slane %v200, 4
        %v213 = vperm.slane %v209, 0
        %v214 = vperm.slane %v210, 0
        %v215 = vmul.f32 %v206, %v213
        %v216 = vmul.f32 %v206, %v214
        %218 = vset.pattern.permute.xlu0 0
        %219 = vperm.xlu0 %218, %v202
        %v220 = vpop.permute.xlu0 %219
        %v222 = vadd.f32 %v220, %v215
        %v223 = vadd.f32 %v220, %v216
        %224 = vset.pattern.permute.xlu0 1
        %225 = vperm.xlu0 %224, %v201
        %v226 = vpop.permute.xlu0 %225
        %v228 = vperm.slane %v200, 1
        %v229 = vperm.slane %v200, 5
        %v232 = vperm.slane %v228, 1
        %v233 = vperm.slane %v229, 1
        %v234 = vmul.f32 %v226, %v232
        %v235 = vmul.f32 %v226, %v233
        %v236 = vadd.f32 %v222, %v234
        %v237 = vadd.f32 %v223, %v235
        %238 = vset.pattern.permute.xlu0 2
        %239 = vperm.xlu0 %238, %v201
        %v240 = vpop.permute.xlu0 %239
        %v242 = vperm.slane %v200, 2
        %v243 = vperm.slane %v200, 6
        %v246 = vperm.slane %v242, 2
        %v247 = vperm.slane %v243, 2
        %v248 = vmul.f32 %v240, %v246
        %v249 = vmul.f32 %v240, %v247
        %v250 = vadd.f32 %v236, %v248
        %v251 = vadd.f32 %v237, %v249
        %252 = vset.pattern.permute.xlu0 3
        %253 = vperm.xlu0 %252, %v201
        %v254 = vpop.permute.xlu0 %253
        %v256 = vperm.slane %v200, 3
        %v257 = vperm.slane %v200, 7
        %v260 = vperm.slane %v256, 3
        %v261 = vperm.slane %v257, 3
        %v262 = vmul.f32 %v254, %v260
        %v263 = vmul.f32 %v254, %v261
        %v264 = vadd.f32 %v250, %v262
        %v265 = vadd.f32 %v251, %v263
        %266 = vst [vmem:[%s188] sm:$0xff] %v264
        %267 = vst [vmem:[%s188 + $0x8] sm:$0xff] %v265
        %s268 = sand.u32 %s109, 1
        %s269 = scalar_lea.sflag [#allocation3], %s268
        %s270 = sand.u32 %s109, 1
        %s271 = smul.addr %s270, 16
        %s272 = scalar_lea.vmem [#allocation2], %s271
        // Predicated region
        $region33: #{tpu_custom_call.1} parent=31 // pred_check
          %p273 = pneg %p119
        $region34: #{tpu_custom_call.1} parent=31 // pred_check_branch
          %275 = sbr.rel (%p273) target = $region36
        $region35: #{tpu_custom_call.1} parent=31 // pred_region
          %s276 = smul.u32 2, %s22
          %278 = vsyncadd %s269, 0
          %s279 = smul.addr %s21, 2
          %s280 = sadd.s32 %s276, %s279
          %s281 = smul.addr %s280, 8
          %s282 = scalar_lea.hbm %s3, %s281
          %s284 = sshll.u32 %s272, 4
          %s285 = int_to_ptr.vmem [resolvable:$true] %s284
          %s286 = sshll.u32 %s282, 4
          %s287 = int_to_ptr.hbm [resolvable:$true] %s286
          %289 = dma.vmem_to_hbm [thread:$0]  %s285, 256, %s287, %s269
        $region36: #{tpu_custom_call.1} parent=31 // pred_fallthru
          _
      $region32: #{tpu_custom_call.1} parent=5 // pred_fallthru
        _
      %p290 = scmp.le.s32.totalorder 2, %s12
      // Predicated region
      $region37: #{tpu_custom_call.1} parent=5 // pred_check
        %p291 = pneg %p290
      $region38: #{tpu_custom_call.1} parent=5 // pred_check_branch
        %293 = sbr.rel (%p291) target = $region40
      $region39: #{tpu_custom_call.1} parent=5 // pred_region
        %s294 = ssub.s32 %s12, 2
        // Predicated region
        $region41: #{tpu_custom_call.1} parent=39 // pred_check
          %p295 = pneg %p125
        $region42: #{tpu_custom_call.1} parent=39 // pred_check_branch
          %297 = sbr.rel (%p295) target = $region44
        $region43: #{tpu_custom_call.1} parent=39 // pred_region
          %s298 = sand.u32 %s110, 1
          %s299 = scalar_lea.sflag [#allocation3], %s298
          %s300 = sand.u32 %s110, 1
          %s301 = smul.addr %s300, 16
          %s302 = scalar_lea.vmem [#allocation2], %s301
          %304 = dma.done %s299, 256
        $region44: #{tpu_custom_call.1} parent=39 // pred_fallthru
          _
      $region40: #{tpu_custom_call.1} parent=5 // pred_fallthru
        _
    $region6: #{tpu_custom_call.1} parent=1 // loop_footer
      %s16 = sadd.s32 1, %s12
    $region7: #{tpu_custom_call.1} parent=1 // loop_footer_branch
      %11 = sbr.rel target = $region3
    $region8: #{tpu_custom_call.1} parent=1 // loop_exit
      _
    %305 = vsyncpa [#allocation3], 1
    %s306 = scalar_lea.sflag [#allocation3], 1
    %307 = vsyncpa %s306, 1

</llo_original>
